<compile_context>
chip_gen: v6e
topology: v6e:2x2x1
jax: 0.10.0
libtpu: 0.0.40
codegen_flags: <defaults>
</compile_context>

<pallas_src>
import functools

import jax
import jax.numpy as jnp
from jax import lax
from jax.experimental import pallas as pl
from jax.experimental.pallas import tpu as pltpu

NUM_ATOMS = 100    # embedding vocab (atoms 0..99), as in creat_embed
NUM_FEAT = 12      # len(self.feat)
VOCAB_PAD = 128    # vocab padded to one lane width
LANE = 128


def _round_up(x, m):
    return (x + m - 1) // m * m


def _pick_tile_n(n_128, tile_n_max=2048, min_steps=2):
    """Token-tile size: a multiple of LANE that divides the lane-padded token
    count exactly (no padding beyond the lane pad -> no wasted HBM writeback,
    no post-kernel slice when n itself is lane-aligned), capped at tile_n_max,
    and leaving >= min_steps grid steps when the problem is large enough so the
    'parallel' token axis can shard across both v7x TensorCores."""
    chunks = n_128 // LANE
    max_chunks = max(1, tile_n_max // LANE)
    if chunks >= min_steps:
        max_chunks = max(1, min(max_chunks, chunks // min_steps))
    best = 1
    for d in range(1, max_chunks + 1):
        if chunks % d == 0:
            best = d
    return best * LANE


# -----------------------------------------------------------------------------
# Kernel: per-token LUT gather as a one-hot bf16 MXU matmul, tiled over tokens.
#   idx_ref    : (num_chunks, 128) int32  -- lane-dense token indices
#   lut_hi_ref : (128, E_pad) bfloat16    -- resident across the whole grid
#   lut_lo_ref : (128, E_pad) bfloat16    -- residual for f32-accurate reconstruction
#   out_ref    : (tile_n, E_pad)
# -----------------------------------------------------------------------------
def gather_lut_kernel(idx_ref, lut_hi_ref, lut_lo_ref, out_ref, *, num_chunks):
    lut_hi = lut_hi_ref[...]                                       # (128, E_pad)
    lut_lo = lut_lo_ref[...]                                       # (128, E_pad)
    vocab_iota = lax.broadcasted_iota(jnp.int32, (VOCAB_PAD, LANE), 0)
    # Contract over the vocab axis (dim 0 of the one-hot) -- no materialized .T.
    dn = (((0,), (0,)), ((), ()))

    def chunk_body(a, token_off):
        row = idx_ref[pl.ds(a, 1), :]                              # (1, 128) int32
        # (vocab, token) one-hot via cheap sublane-broadcast compare; 0/1 exact in bf16.
        onehot = (row == vocab_iota).astype(jnp.bfloat16)          # (128, 128)
        acc = lax.dot_general(onehot, lut_hi, dn,
                              preferred_element_type=jnp.float32)  # (128, E_pad)
        acc = acc + lax.dot_general(onehot, lut_lo, dn,
                                    preferred_element_type=jnp.float32)
        out_ref[pl.ds(token_off, LANE), :] = acc.astype(out_ref.dtype)

    if num_chunks <= 8:
        # Small tile: full static unroll (LLO scheduler visibility, no loop overhead).
        for a in range(num_chunks):
            chunk_body(a, a * LANE)
    else:
        # Large tile: partially-unrolled fori_loop bounds vreg live ranges.
        def body(a, carry):
            chunk_body(a, pl.multiple_of(a * LANE, LANE))
            return carry
        lax.fori_loop(0, num_chunks, body, 0, unroll=2)


def feat_embedding_forward(x, table, w1, b1, w2, b2, *,
                           tile_n_max=2048, out_dtype=jnp.float32):
    """x: (batch, seq) integer atom indices in [0, 100). Returns (batch, seq, E)."""
    batch, seq = x.shape
    e_dim = w1.shape[1]
    e_pad = _round_up(e_dim, LANE)            # lane-dense output stores
    n = batch * seq

    # --- Stage 1 (plain XLA, negligible flops): fold the frozen table through
    # the MLP into a (128, E) LUT; exact f32 for valid rows. ---
    table_pad = jnp.pad(table.astype(jnp.float32),
                        ((0, VOCAB_PAD - NUM_ATOMS), (0, 0)))
    with jax.default_matmul_precision("highest"):
        h = jnp.maximum(table_pad @ w1 + b1[0], 0.0)
        lut = h @ w2 + b2[0]                                       # (128, E) f32
    if e_pad != e_dim:
        lut = jnp.pad(lut, ((0, 0), (0, e_pad - e_dim)))
    # hi/lo bf16 split: single-pass bf16 MXU matmuls with f32-accurate result.
    lut_hi = lut.astype(jnp.bfloat16)
    lut_lo = (lut - lut_hi.astype(jnp.float32)).astype(jnp.bfloat16)

    # --- Stage 2: tiled, pipelined one-hot MXU gather over the token axis. ---
    n_128 = max(_round_up(n, LANE), LANE)
    tile_n = _pick_tile_n(n_128, tile_n_max=tile_n_max)
    n_pad = n_128                              # tile_n divides n_128 by construction
    num_chunks = tile_n // LANE

    idx = jnp.zeros((n_pad,), jnp.int32).at[:n].set(
        x.reshape(-1).astype(jnp.int32))
    idx2d = idx.reshape(n_pad // LANE, LANE)   # lane-dense index layout

    # Explicit scoped-VMEM budget: double-buffered idx/out tiles + resident bf16
    # LUTs, with headroom; capped at 32 MiB (safe on v5e / v6e / v7x).
    out_bytes = jnp.dtype(out_dtype).itemsize
    vmem_bytes = (2 * num_chunks * LANE * 4            # idx tiles (double buffered)
                  + 2 * tile_n * e_pad * out_bytes     # output tiles (double buffered)
                  + 2 * 2 * VOCAB_PAD * e_pad * 2)     # resident bf16 LUTs
    vmem_limit = int(min(max(4 * vmem_bytes, 8 << 20), 32 << 20))

    out = pl.pallas_call(
        functools.partial(gather_lut_kernel, num_chunks=num_chunks),
        out_shape=jax.ShapeDtypeStruct((n_pad, e_pad), out_dtype),
        grid=(n_pad // tile_n,),
        in_specs=[
            pl.BlockSpec((num_chunks, LANE), lambda i: (i, 0)),
            pl.BlockSpec((VOCAB_PAD, e_pad), lambda i: (0, 0)),
            pl.BlockSpec((VOCAB_PAD, e_pad), lambda i: (0, 0)),
        ],
        out_specs=pl.BlockSpec((tile_n, e_pad), lambda i: (i, 0)),
        compiler_params=pltpu.CompilerParams(
            dimension_semantics=("parallel",),         # token tiles shard across TCs (v7x)
            vmem_limit_bytes=vmem_limit),
    )(idx2d, lut_hi, lut_lo)

    if n_pad == n and e_pad == e_dim:
        return out.reshape(batch, seq, e_dim)          # no post-kernel slice copy
    return out[:n, :e_dim].reshape(batch, seq, e_dim)


def make_params(key, embed_dim, src_vocab):
    """Deterministic synthetic parameters (shapes match the PyTorch module).

    # TODO(synk): the real module fills the frozen table from `mendeleev`
    # element properties; that host-side lookup has no kernel equivalent, so
    # the table is synthesized deterministically here (rows for atoms not in
    # src_vocab are zeroed, matching creat_embed).
    """
    k_tab, k_w1, k_b1, k_w2, k_b2 = jax.random.split(key, 5)

    table = jax.random.normal(k_tab, (NUM_ATOMS, NUM_FEAT), jnp.float32)
    vocab_mask = jnp.zeros((NUM_ATOMS,), jnp.float32).at[
        jnp.asarray(sorted(src_vocab), jnp.int32)].set(1.0)
    table = table * vocab_mask[:, None]

    # nn.Linear stores W as (out, in); we keep (in, out) so y = x @ W + b.
    w1 = jax.random.normal(k_w1, (NUM_FEAT, embed_dim), jnp.float32) * 0.1
    b1 = jax.random.normal(k_b1, (1, embed_dim), jnp.float32) * 0.1
    w2 = jax.random.normal(k_w2, (embed_dim, embed_dim), jnp.float32) * 0.1
    b2 = jax.random.normal(k_b2, (1, embed_dim), jnp.float32) * 0.1
    return table, w1, b1, w2, b2


def reference_forward(x, table, w1, b1, w2, b2):
    with jax.default_matmul_precision("highest"):
        emb = table[x]                              # (B, S, 12)
        h = jnp.maximum(emb @ w1 + b1[0], 0.0)      # (B, S, E)
        return h @ w2 + b2[0]                       # (B, S, E)


if __name__ == "__main__":
    key = jax.random.PRNGKey(0)
    # embed_dim is a multiple of 128 so output writeback is lane-dense (unmasked
    # vst); the kernel also supports other E via internal lane padding.
    batch, seq, embed_dim = 2, 8, 128
    src_vocab = set(range(1, 40))                   # e.g. atoms 1..39 are "known"

    k_params, k_x = jax.random.split(key)
    table, w1, b1, w2, b2 = make_params(k_params, embed_dim, src_vocab)

    x = jax.random.randint(k_x, (batch, seq), 0, NUM_ATOMS, dtype=jnp.int32)

    out = feat_embedding_forward(x, table, w1, b1, w2, b2)
    out = jax.block_until_ready(out)

    ref = reference_forward(x, table, w1, b1, w2, b2)
    assert out.shape == (batch, seq, embed_dim)
    assert jnp.allclose(out, ref, atol=1e-4, rtol=1e-4), \
        float(jnp.max(jnp.abs(out - ref)))

    print("KERNEL_OK")
</pallas_src>

<mosaic_0001>
module attributes {stable_mosaic.version = 11 : i64} {
  func.func @gather_lut_kernel(%arg0: i32, %arg1: memref<1x128xi32, #tpu.memory_space<vmem>>, %arg2: memref<128x128xbf16, #tpu.memory_space<vmem>>, %arg3: memref<128x128xbf16, #tpu.memory_space<vmem>>, %arg4: memref<128x128xf32, #tpu.memory_space<vmem>>) attributes {dimension_semantics = [#tpu.dimension_semantics<parallel>], iteration_bounds = array<i64: 1>, scalar_prefetch = 0 : i64, scratch_operands = 0 : i64, tpu.core_type = #tpu.core_type<tc>, window_params = [{transform_indices = @transform_0, window_bounds = array<i64: 1, 128>}, {pipeline_mode = #tpu.pipeline_mode<synchronous>, transform_indices = @transform_1, window_bounds = array<i64: 128, 128>}, {pipeline_mode = #tpu.pipeline_mode<synchronous>, transform_indices = @transform_2, window_bounds = array<i64: 128, 128>}, {transform_indices = @transform_3, window_bounds = array<i64: 128, 128>}]} {
    %c0 = arith.constant 0 : index
    %c0_0 = arith.constant 0 : index
    %0 = vector.load %arg2[%c0, %c0_0] : memref<128x128xbf16, #tpu.memory_space<vmem>>, vector<128x128xbf16>
    %c0_1 = arith.constant 0 : index
    %c0_2 = arith.constant 0 : index
    %1 = vector.load %arg3[%c0_1, %c0_2] : memref<128x128xbf16, #tpu.memory_space<vmem>>, vector<128x128xbf16>
    %2 = tpu.iota {dimensions = array<i32: 0>} : vector<128x128xi32>
    %c0_3 = arith.constant 0 : index
    %c0_4 = arith.constant 0 : index
    %3 = vector.load %arg1[%c0_3, %c0_4] : memref<1x128xi32, #tpu.memory_space<vmem>>, vector<1x128xi32>
    %4 = vector.broadcast %3 : vector<1x128xi32> to vector<128x128xi32>
    %5 = arith.cmpi eq, %4, %2 : vector<128x128xi32>
    %6 = arith.extui %5 : vector<128x128xi1> to vector<128x128xi32>
    %7 = arith.sitofp %6 : vector<128x128xi32> to vector<128x128xf32>
    %8 = arith.truncf %7 : vector<128x128xf32> to vector<128x128xbf16>
    %cst = arith.constant dense<0.000000e+00> : vector<128x128xf32>
    %9 = tpu.matmul %8, %0, %cst {dimension_numbers = #tpu.dot_dimension_numbers<[0], [0], [1], [1], [0, 1, 1, 1], [], []>} : vector<128x128xbf16>, vector<128x128xbf16>, vector<128x128xf32> -> vector<128x128xf32>
    %cst_5 = arith.constant dense<0.000000e+00> : vector<128x128xf32>
    %10 = tpu.matmul %8, %1, %cst_5 {dimension_numbers = #tpu.dot_dimension_numbers<[0], [0], [1], [1], [0, 1, 1, 1], [], []>} : vector<128x128xbf16>, vector<128x128xbf16>, vector<128x128xf32> -> vector<128x128xf32>
    %11 = arith.addf %9, %10 : vector<128x128xf32>
    %c0_6 = arith.constant 0 : index
    %c0_7 = arith.constant 0 : index
    %12 = vector.load %arg4[%c0_6, %c0_7] : memref<128x128xf32, #tpu.memory_space<vmem>>, vector<128x128xf32>
    tpu.vector_store %arg4[%c0_6, %c0_7], %11 {strides = array<i32>} : memref<128x128xf32, #tpu.memory_space<vmem>>, vector<128x128xf32>,
    return
  }
  func.func @transform_0(%arg0: i32) -> (i32, i32) {
    %c0_i32 = arith.constant 0 : i32
    %c0_i32_0 = arith.constant 0 : i32
    return %arg0, %c0_i32 : i32, i32
  }
  func.func @transform_1(%arg0: i32) -> (i32, i32) {
    %c0_i32 = arith.constant 0 : i32
    %c0_i32_0 = arith.constant 0 : i32
    %c0_i32_1 = arith.constant 0 : i32
    return %c0_i32, %c0_i32_0 : i32, i32
  }
  func.func @transform_2(%arg0: i32) -> (i32, i32) {
    %c0_i32 = arith.constant 0 : i32
    %c0_i32_0 = arith.constant 0 : i32
    %c0_i32_1 = arith.constant 0 : i32
    return %c0_i32, %c0_i32_0 : i32, i32
  }
  func.func @transform_3(%arg0: i32) -> (i32, i32) {
    %c0_i32 = arith.constant 0 : i32
    %c0_i32_0 = arith.constant 0 : i32
    return %arg0, %c0_i32 : i32, i32
  }
}

</mosaic_0001>

<llo_original>
// kernel: tpu_custom_call.1
$region0: #{tpu_custom_call.1}
  #allocation0 [shape = 'u32[]', space=smem, size = 0x4, offset = 0x4, fixed_abs, tag = 'smem constant byte address 0x4 - core index']
  #allocation1 [shape = 'u32[144,128]{1,0:T(1,128)}', space=vmem, size = 0x12000, scoped, tag = 'internal scratch']
  %s0 = inlined_call_operand.hbm [shape: s32[1,128], index: 0, kind: input, shape index: {}]
  %s1 = inlined_call_operand.hbm [shape: bf16[128,128], index: 1, kind: input, shape index: {}]
  %s2 = inlined_call_operand.hbm [shape: bf16[128,128], index: 2, kind: input, shape index: {}]
  %s3 = inlined_call_operand.hbm [shape: f32[128,128], index: 3, kind: output, shape index: {}]
  %s4 = sld [smem:[#allocation0]]
  $region34: #{tpu_custom_call.1} parent=0
    _
  %s6 = ssub.s32 1, %s4
  %s7 = scalar_select 0, %s6, %s4
  $region1: #{tpu_custom_call.1} parent=0
    #allocation2 [shape = 'u8[512]{0}', space=vmem, size = 0x400, scoped, tag = 'input window, operand 0, single buffered']
    #allocation3 [shape = 's32[1]{0}', space=sflag, size = 0x4, scoped, tag = 'scoped memory for tpu_custom_call.1']
    #allocation4 [shape = 's32[1]{0}', space=sflag, size = 0x4, scoped, tag = 'scoped memory for tpu_custom_call.1']
    #allocation5 [shape = 'u8[32768]{0}', space=vmem, size = 0x8000, scoped, tag = 'input window, operand 1, single buffered']
    #allocation6 [shape = 's32[1]{0}', space=sflag, size = 0x4, scoped, tag = 'scoped memory for tpu_custom_call.1']
    #allocation7 [shape = 'u8[32768]{0}', space=vmem, size = 0x8000, scoped, tag = 'input window, operand 2, single buffered']
    #allocation8 [shape = 'u8[65536]{0}', space=vmem, size = 0x10000, scoped, tag = 'output window, operand 0, single buffered']
    %8 = vsyncpa [#allocation3], 0
    %9 = vsyncpa [#allocation6], 0
    %10 = vsyncpa [#allocation4], 0
    // Predicated region
    $region2: #{tpu_custom_call.1} parent=1 // pred_check
      _
    $region3: #{tpu_custom_call.1} parent=1 // pred_check_branch
      %12 = sbr.rel (0) target = $region5
    $region4: #{tpu_custom_call.1} parent=1 // pred_region
      %s14 = ssub.s32 16, 16
      %15 = vsyncadd [#allocation3], %s14
      %s17 = sshll.u32 [#allocation2], 4
      %s18 = int_to_ptr.vmem [resolvable:$true] %s17
      %20 = dma.hbm_to_vmem [thread:$0]  %s0, 16, %s18, [#allocation3]
    $region5: #{tpu_custom_call.1} parent=1 // pred_fallthru
      _
    // Predicated region
    $region6: #{tpu_custom_call.1} parent=1 // pred_check
      _
    $region7: #{tpu_custom_call.1} parent=1 // pred_check_branch
      %22 = sbr.rel (0) target = $region9
    $region8: #{tpu_custom_call.1} parent=1 // pred_region
      %s24 = ssub.s32 1024, 1024
      %25 = vsyncadd [#allocation6], %s24
      %s26 = sshll.u32 [#allocation5], 4
      %s27 = int_to_ptr.vmem [resolvable:$true] %s26
      %32 = dma.hbm_to_vmem [thread:$0]  %s1, 1024, %s27, [#allocation6], 64, 64, 4
    $region9: #{tpu_custom_call.1} parent=1 // pred_fallthru
      _
    // Predicated region
    $region10: #{tpu_custom_call.1} parent=1 // pred_check
      _
    $region11: #{tpu_custom_call.1} parent=1 // pred_check_branch
      %34 = sbr.rel (0) target = $region13
    $region12: #{tpu_custom_call.1} parent=1 // pred_region
      %s36 = ssub.s32 1024, 1024
      %37 = vsyncadd [#allocation6], %s36
      %s38 = sshll.u32 [#allocation7], 4
      %s39 = int_to_ptr.vmem [resolvable:$true] %s38
      %44 = dma.hbm_to_vmem [thread:$0]  %s2, 1024, %s39, [#allocation6], 64, 64, 4
    $region13: #{tpu_custom_call.1} parent=1 // pred_fallthru
      _
    // Predicated region
    $region14: #{tpu_custom_call.1} parent=1 // pred_check
      _
    $region15: #{tpu_custom_call.1} parent=1 // pred_check_branch
      %46 = sbr.rel (0) target = $region17
    $region16: #{tpu_custom_call.1} parent=1 // pred_region
      %47 = dma.done [#allocation3], 16
    $region17: #{tpu_custom_call.1} parent=1 // pred_fallthru
      _
    // Predicated region
    $region18: #{tpu_custom_call.1} parent=1 // pred_check
      _
    $region19: #{tpu_custom_call.1} parent=1 // pred_check_branch
      %49 = sbr.rel (0) target = $region21
    $region20: #{tpu_custom_call.1} parent=1 // pred_region
      %50 = dma.done [#allocation6], 1024
    $region21: #{tpu_custom_call.1} parent=1 // pred_fallthru
      _
    // Predicated region
    $region22: #{tpu_custom_call.1} parent=1 // pred_check
      _
    $region23: #{tpu_custom_call.1} parent=1 // pred_check_branch
      %52 = sbr.rel (0) target = $region25
    $region24: #{tpu_custom_call.1} parent=1 // pred_region
      %53 = dma.done [#allocation6], 1024
    $region25: #{tpu_custom_call.1} parent=1 // pred_fallthru
      _
    %v55 = vld [vmem:[#allocation5] sm:$0xf]
    %v56 = vld [vmem:[#allocation5 + $0x4] sm:$0xf]
    %v57 = vld [vmem:[#allocation5 + $0x8] sm:$0xf]
    %v58 = vld [vmem:[#allocation5 + $0xc] sm:$0xf]
    %v59 = vld [vmem:[#allocation5 + $0x10] sm:$0xf]
    %v60 = vld [vmem:[#allocation5 + $0x14] sm:$0xf]
    %v61 = vld [vmem:[#allocation5 + $0x18] sm:$0xf]
    %v62 = vld [vmem:[#allocation5 + $0x1c] sm:$0xf]
    %v63 = vld [vmem:[#allocation5 + $0x20] sm:$0xf]
    %v64 = vld [vmem:[#allocation5 + $0x24] sm:$0xf]
    %v65 = vld [vmem:[#allocation5 + $0x28] sm:$0xf]
    %v66 = vld [vmem:[#allocation5 + $0x2c] sm:$0xf]
    %v67 = vld [vmem:[#allocation5 + $0x30] sm:$0xf]
    %v68 = vld [vmem:[#allocation5 + $0x34] sm:$0xf]
    %v69 = vld [vmem:[#allocation5 + $0x38] sm:$0xf]
    %v70 = vld [vmem:[#allocation5 + $0x3c] sm:$0xf]
    %v71 = vld [vmem:[#allocation7] sm:$0xf]
    %v72 = vld [vmem:[#allocation7 + $0x4] sm:$0xf]
    %v73 = vld [vmem:[#allocation7 + $0x8] sm:$0xf]
    %v74 = vld [vmem:[#allocation7 + $0xc] sm:$0xf]
    %v75 = vld [vmem:[#allocation7 + $0x10] sm:$0xf]
    %v76 = vld [vmem:[#allocation7 + $0x14] sm:$0xf]
    %v77 = vld [vmem:[#allocation7 + $0x18] sm:$0xf]
    %v78 = vld [vmem:[#allocation7 + $0x1c] sm:$0xf]
    %v79 = vld [vmem:[#allocation7 + $0x20] sm:$0xf]
    %v80 = vld [vmem:[#allocation7 + $0x24] sm:$0xf]
    %v81 = vld [vmem:[#allocation7 + $0x28] sm:$0xf]
    %v82 = vld [vmem:[#allocation7 + $0x2c] sm:$0xf]
    %v83 = vld [vmem:[#allocation7 + $0x30] sm:$0xf]
    %v84 = vld [vmem:[#allocation7 + $0x34] sm:$0xf]
    %v85 = vld [vmem:[#allocation7 + $0x38] sm:$0xf]
    %v86 = vld [vmem:[#allocation7 + $0x3c] sm:$0xf]
    %v87 = vlaneseq
    %v88 = vshrl.u32 %v87, 7
    %v89 = vadd.s32 %v88, 8
    %v90 = vadd.s32 %v88, 16
    %v91 = vadd.s32 %v88, 24
    %v92 = vadd.s32 %v88, 32
    %v93 = vadd.s32 %v88, 40
    %v94 = vadd.s32 %v88, 48
    %v95 = vadd.s32 %v88, 56
    %v96 = vadd.s32 %v88, 64
    %v97 = vadd.s32 %v88, 72
    %v98 = vadd.s32 %v88, 80
    %v99 = vadd.s32 %v88, 88
    %v100 = vadd.s32 %v88, 96
    %v101 = vadd.s32 %v88, 104
    %v102 = vadd.s32 %v88, 112
    %v103 = vadd.s32 %v88, 120
    %v104 = vld [vmem:[#allocation2] sm:$0x1]
    %v105 = vlaneseq
    %v106 = vshrl.u32 %v105, 7
    %v107 = vsub.s32 0, %v106
    %v108 = vrot.slane %v104, %v107
    %vm109 = vcmp.eq.s32.totalorder %v108, %v88
    %vm110 = vcmp.eq.s32.totalorder %v108, %v89
    %vm111 = vcmp.eq.s32.totalorder %v108, %v90
    %vm112 = vcmp.eq.s32.totalorder %v108, %v91
    %vm113 = vcmp.eq.s32.totalorder %v108, %v92
    %vm114 = vcmp.eq.s32.totalorder %v108, %v93
    %vm115 = vcmp.eq.s32.totalorder %v108, %v94
    %vm116 = vcmp.eq.s32.totalorder %v108, %v95
    %vm117 = vcmp.eq.s32.totalorder %v108, %v96
    %vm118 = vcmp.eq.s32.totalorder %v108, %v97
    %vm119 = vcmp.eq.s32.totalorder %v108, %v98
    %vm120 = vcmp.eq.s32.totalorder %v108, %v99
    %vm121 = vcmp.eq.s32.totalorder %v108, %v100
    %vm122 = vcmp.eq.s32.totalorder %v108, %v101
    %vm123 = vcmp.eq.s32.totalorder %v108, %v102
    %vm124 = vcmp.eq.s32.totalorder %v108, %v103
    %v125 = vsel %vm109, 1, 0
    %v126 = vsel %vm110, 1, 0
    %v127 = vsel %vm111, 1, 0
    %v128 = vsel %vm112, 1, 0
    %v129 = vsel %vm113, 1, 0
    %v130 = vsel %vm114, 1, 0
    %v131 = vsel %vm115, 1, 0
    %v132 = vsel %vm116, 1, 0
    %v133 = vsel %vm117, 1, 0
    %v134 = vsel %vm118, 1, 0
    %v135 = vsel %vm119, 1, 0
    %v136 = vsel %vm120, 1, 0
    %v137 = vsel %vm121, 1, 0
    %v138 = vsel %vm122, 1, 0
    %v139 = vsel %vm123, 1, 0
    %v140 = vsel %vm124, 1, 0
    %v141 = vcvt.s32.f32 %v125
    %v142 = vcvt.s32.f32 %v126
    %v143 = vcvt.s32.f32 %v127
    %v144 = vcvt.s32.f32 %v128
    %v145 = vcvt.s32.f32 %v129
    %v146 = vcvt.s32.f32 %v130
    %v147 = vcvt.s32.f32 %v131
    %v148 = vcvt.s32.f32 %v132
    %v149 = vcvt.s32.f32 %v133
    %v150 = vcvt.s32.f32 %v134
    %v151 = vcvt.s32.f32 %v135
    %v152 = vcvt.s32.f32 %v136
    %v153 = vcvt.s32.f32 %v137
    %v154 = vcvt.s32.f32 %v138
    %v155 = vcvt.s32.f32 %v139
    %v156 = vcvt.s32.f32 %v140
    %v157 = vpack.c.bf16 %v142, %v141
    %v158 = vpack.c.bf16 %v144, %v143
    %v159 = vpack.c.bf16 %v146, %v145
    %v160 = vpack.c.bf16 %v148, %v147
    %v161 = vpack.c.bf16 %v150, %v149
    %v162 = vpack.c.bf16 %v152, %v151
    %v163 = vpack.c.bf16 %v154, %v153
    %v164 = vpack.c.bf16 %v156, %v155
    %165 = vxpose.xlu0.c.b16.start [1/8] %v157, 128
    %166 = vxpose.xlu0.c.b16.cont [2/8] %v158, 128
    %167 = vxpose.xlu0.c.b16.cont [3/8] %v159, 128
    %168 = vxpose.xlu0.c.b16.cont [4/8] %v160, 128
    %169 = vxpose.xlu0.c.b16.cont [5/8] %v161, 128
    %170 = vxpose.xlu0.c.b16.cont [6/8] %v162, 128
    %171 = vxpose.xlu0.c.b16.cont [7/8] %v163, 128
    %172 = vxpose.xlu0.c.b16.end [8/8] %v164, 128
    %v173 = vpop.trf.xlu0
    %v174 = vpop.trf.xlu0
    %v175 = vpop.trf.xlu0
    %v176 = vpop.trf.xlu0
    %v177 = vpop.trf.xlu0
    %v178 = vpop.trf.xlu0
    %v179 = vpop.trf.xlu0
    %v180 = vpop.trf.xlu0
    %v197 = vunpack.c.l.b16 %v71
    %v198 = vunpack.c.l.b16 %v72
    %v199 = vunpack.c.l.b16 %v73
    %v200 = vunpack.c.l.b16 %v74
    %v201 = vunpack.c.l.b16 %v75
    %v202 = vunpack.c.l.b16 %v76
    %v203 = vunpack.c.l.b16 %v77
    %v204 = vunpack.c.l.b16 %v78
    %v205 = vunpack.c.l.b16 %v79
    %v206 = vunpack.c.l.b16 %v80
    %v207 = vunpack.c.l.b16 %v81
    %v208 = vunpack.c.l.b16 %v82
    %v209 = vunpack.c.l.b16 %v83
    %v210 = vunpack.c.l.b16 %v84
    %v211 = vunpack.c.l.b16 %v85
    %v212 = vunpack.c.l.b16 %v86
    %v213 = vpack.c.b16 %v198, %v197
    %v214 = vpack.c.b16 %v200, %v199
    %v215 = vpack.c.b16 %v202, %v201
    %v216 = vpack.c.b16 %v204, %v203
    %v217 = vpack.c.b16 %v206, %v205
    %v218 = vpack.c.b16 %v208, %v207
    %v219 = vpack.c.b16 %v210, %v209
    %v220 = vpack.c.b16 %v212, %v211
    %229 = vmatprep.subr.bf16.mxu0 0
    %230 = vmatpush1.bf16.msra.mxu0 %v220
    %231 = vmatprep.subr.bf16.mxu0 0
    %232 = vmatpush1.bf16.msra.mxu0 %v219
    %233 = vmatprep.subr.bf16.mxu0 0
    %234 = vmatpush1.bf16.msra.mxu0 %v218
    %235 = vmatprep.subr.bf16.mxu0 0
    %236 = vmatpush1.bf16.msra.mxu0 %v217
    %237 = vmatprep.subr.bf16.mxu0 0
    %238 = vmatpush1.bf16.msra.mxu0 %v216
    %239 = vmatprep.subr.bf16.mxu0 0
    %240 = vmatpush1.bf16.msra.mxu0 %v215
    %241 = vmatprep.subr.bf16.mxu0 0
    %242 = vmatpush1.bf16.msra.mxu0 %v214
    %243 = vmatprep.subr.bf16.mxu0 0
    %244 = vmatpush1.bf16.msra.mxu0 %v213
    %245 = vmatprep.subr.bf16.mxu0 0
    %246 = vmatpush2.bf16.msra.mxu0 0
    %247 = vmatprep.subr.bf16.mxu0 0
    %248 = vmatpush2.bf16.msra.mxu0 0
    %249 = vmatprep.subr.bf16.mxu0 0
    %250 = vmatpush2.bf16.msra.mxu0 0
    %251 = vmatprep.subr.bf16.mxu0 0
    %252 = vmatpush2.bf16.msra.mxu0 0
    %253 = vmatprep.subr.bf16.mxu0 0
    %254 = vmatpush2.bf16.msra.mxu0 0
    %255 = vmatprep.subr.bf16.mxu0 0
    %256 = vmatpush2.bf16.msra.mxu0 0
    %257 = vmatprep.subr.bf16.mxu0 0
    %258 = vmatpush2.bf16.msra.mxu0 0
    %259 = vmatprep.subr.bf16.mxu0 0
    %260 = vmatpush2.bf16.msra.mxu0 0
    %261 = vmatprep.mubr.bf16.mxu0 0
    %262 = vmatmul.mubr.bf16.gmra.mxu0 %v173
    %v263 = vpop.f32.mrf.mxu0
    %v264 = vadd.f32 0.0, %v263
    %v265 = vpop.f32.mrf.mxu0
    %v266 = vpop.f32.mrf.mxu0
    %v267 = vadd.f32 0.0, %v266
    %v268 = vpop.f32.mrf.mxu0
    %269 = vmatprep.mubr.bf16.mxu0 0
    %270 = vmatmul.mubr.bf16.gmra.mxu0 %v174
    %v271 = vpop.f32.mrf.mxu0
    %v272 = vadd.f32 0.0, %v271
    %v273 = vpop.f32.mrf.mxu0
    %v274 = vpop.f32.mrf.mxu0
    %v275 = vadd.f32 0.0, %v274
    %v276 = vpop.f32.mrf.mxu0
    %277 = vmatprep.mubr.bf16.mxu0 0
    %278 = vmatmul.mubr.bf16.gmra.mxu0 %v175
    %v279 = vpop.f32.mrf.mxu0
    %v280 = vadd.f32 0.0, %v279
    %v281 = vpop.f32.mrf.mxu0
    %v282 = vpop.f32.mrf.mxu0
    %v283 = vadd.f32 0.0, %v282
    %v284 = vpop.f32.mrf.mxu0
    %285 = vmatprep.mubr.bf16.mxu0 0
    %286 = vmatmul.mubr.bf16.gmra.mxu0 %v176
    %v287 = vpop.f32.mrf.mxu0
    %v288 = vadd.f32 0.0, %v287
    %v289 = vpop.f32.mrf.mxu0
    %v290 = vpop.f32.mrf.mxu0
    %v291 = vadd.f32 0.0, %v290
    %v292 = vpop.f32.mrf.mxu0
    %293 = vmatprep.mubr.bf16.mxu0 0
    %294 = vmatmul.mubr.bf16.gmra.mxu0 %v177
    %v295 = vpop.f32.mrf.mxu0
    %v296 = vadd.f32 0.0, %v295
    %v297 = vpop.f32.mrf.mxu0
    %v298 = vpop.f32.mrf.mxu0
    %v299 = vadd.f32 0.0, %v298
    %v300 = vpop.f32.mrf.mxu0
    %301 = vmatprep.mubr.bf16.mxu0 0
    %302 = vmatmul.mubr.bf16.gmra.mxu0 %v178
    %v303 = vpop.f32.mrf.mxu0
    %v304 = vadd.f32 0.0, %v303
    %v305 = vpop.f32.mrf.mxu0
    %v306 = vpop.f32.mrf.mxu0
    %v307 = vadd.f32 0.0, %v306
    %v308 = vpop.f32.mrf.mxu0
    %309 = vmatprep.mubr.bf16.mxu0 0
    %310 = vmatmul.mubr.bf16.gmra.mxu0 %v179
    %v311 = vpop.f32.mrf.mxu0
    %v312 = vadd.f32 0.0, %v311
    %v313 = vpop.f32.mrf.mxu0
    %v314 = vpop.f32.mrf.mxu0
    %v315 = vadd.f32 0.0, %v314
    %v316 = vpop.f32.mrf.mxu0
    %317 = vmatprep.mubr.bf16.mxu0 0
    %318 = vmatmul.mubr.bf16.gmra.mxu0 %v180
    %v319 = vpop.f32.mrf.mxu0
    %v320 = vadd.f32 0.0, %v319
    %v321 = vpop.f32.mrf.mxu0
    %v322 = vpop.f32.mrf.mxu0
    %v323 = vadd.f32 0.0, %v322
    %v324 = vpop.f32.mrf.mxu0
    %325 = vdwg.mxu0
    %v342 = vunpack.c.l.b16 %v55
    %v343 = vunpack.c.l.b16 %v56
    %v344 = vunpack.c.l.b16 %v57
    %v345 = vunpack.c.l.b16 %v58
    %v346 = vunpack.c.l.b16 %v59
    %v347 = vunpack.c.l.b16 %v60
    %v348 = vunpack.c.l.b16 %v61
    %v349 = vunpack.c.l.b16 %v62
    %v350 = vunpack.c.l.b16 %v63
    %v351 = vunpack.c.l.b16 %v64
    %v352 = vunpack.c.l.b16 %v65
    %v353 = vunpack.c.l.b16 %v66
    %v354 = vunpack.c.l.b16 %v67
    %v355 = vunpack.c.l.b16 %v68
    %v356 = vunpack.c.l.b16 %v69
    %v357 = vunpack.c.l.b16 %v70
    %v358 = vpack.c.b16 %v343, %v342
    %v359 = vpack.c.b16 %v345, %v344
    %v360 = vpack.c.b16 %v347, %v346
    %v361 = vpack.c.b16 %v349, %v348
    %v362 = vpack.c.b16 %v351, %v350
    %v363 = vpack.c.b16 %v353, %v352
    %v364 = vpack.c.b16 %v355, %v354
    %v365 = vpack.c.b16 %v357, %v356
    %374 = vmatprep.subr.bf16.mxu0 0
    %375 = vmatpush1.bf16.msra.mxu0 %v365
    %376 = vmatprep.subr.bf16.mxu0 0
    %377 = vmatpush1.bf16.msra.mxu0 %v364
    %378 = vmatprep.subr.bf16.mxu0 0
    %379 = vmatpush1.bf16.msra.mxu0 %v363
    %380 = vmatprep.subr.bf16.mxu0 0
    %381 = vmatpush1.bf16.msra.mxu0 %v362
    %382 = vmatprep.subr.bf16.mxu0 0
    %383 = vmatpush1.bf16.msra.mxu0 %v361
    %384 = vmatprep.subr.bf16.mxu0 0
    %385 = vmatpush1.bf16.msra.mxu0 %v360
    %386 = vmatprep.subr.bf16.mxu0 0
    %387 = vmatpush1.bf16.msra.mxu0 %v359
    %388 = vmatprep.subr.bf16.mxu0 0
    %389 = vmatpush1.bf16.msra.mxu0 %v358
    %390 = vmatprep.subr.bf16.mxu0 0
    %391 = vmatpush2.bf16.msra.mxu0 0
    %392 = vmatprep.subr.bf16.mxu0 0
    %393 = vmatpush2.bf16.msra.mxu0 0
    %394 = vmatprep.subr.bf16.mxu0 0
    %395 = vmatpush2.bf16.msra.mxu0 0
    %396 = vmatprep.subr.bf16.mxu0 0
    %397 = vmatpush2.bf16.msra.mxu0 0
    %398 = vmatprep.subr.bf16.mxu0 0
    %399 = vmatpush2.bf16.msra.mxu0 0
    %400 = vmatprep.subr.bf16.mxu0 0
    %401 = vmatpush2.bf16.msra.mxu0 0
    %402 = vmatprep.subr.bf16.mxu0 0
    %403 = vmatpush2.bf16.msra.mxu0 0
    %404 = vmatprep.subr.bf16.mxu0 0
    %405 = vmatpush2.bf16.msra.mxu0 0
    %406 = vmatprep.mubr.bf16.mxu0 0
    %407 = vmatmul.mubr.bf16.gmra.mxu0 %v173
    %v408 = vpop.f32.mrf.mxu0
    %v409 = vadd.f32 %v264, %v408
    %v410 = vpop.f32.mrf.mxu0
    %v411 = vpop.f32.mrf.mxu0
    %v412 = vadd.f32 %v267, %v411
    %v413 = vpop.f32.mrf.mxu0
    %414 = vmatprep.mubr.bf16.mxu0 0
    %415 = vmatmul.mubr.bf16.gmra.mxu0 %v174
    %v416 = vpop.f32.mrf.mxu0
    %v417 = vadd.f32 %v272, %v416
    %v418 = vpop.f32.mrf.mxu0
    %v419 = vpop.f32.mrf.mxu0
    %v420 = vadd.f32 %v275, %v419
    %v421 = vpop.f32.mrf.mxu0
    %422 = vmatprep.mubr.bf16.mxu0 0
    %423 = vmatmul.mubr.bf16.gmra.mxu0 %v175
    %v424 = vpop.f32.mrf.mxu0
    %v425 = vadd.f32 %v280, %v424
    %v426 = vpop.f32.mrf.mxu0
    %v427 = vpop.f32.mrf.mxu0
    %v428 = vadd.f32 %v283, %v427
    %v429 = vpop.f32.mrf.mxu0
    %430 = vmatprep.mubr.bf16.mxu0 0
    %431 = vmatmul.mubr.bf16.gmra.mxu0 %v176
    %v432 = vpop.f32.mrf.mxu0
    %v433 = vadd.f32 %v288, %v432
    %v434 = vpop.f32.mrf.mxu0
    %v435 = vpop.f32.mrf.mxu0
    %v436 = vadd.f32 %v291, %v435
    %v437 = vpop.f32.mrf.mxu0
    %438 = vmatprep.mubr.bf16.mxu0 0
    %439 = vmatmul.mubr.bf16.gmra.mxu0 %v177
    %v440 = vpop.f32.mrf.mxu0
    %v441 = vadd.f32 %v296, %v440
    %v442 = vpop.f32.mrf.mxu0
    %v443 = vpop.f32.mrf.mxu0
    %v444 = vadd.f32 %v299, %v443
    %v445 = vpop.f32.mrf.mxu0
    %446 = vmatprep.mubr.bf16.mxu0 0
    %447 = vmatmul.mubr.bf16.gmra.mxu0 %v178
    %v448 = vpop.f32.mrf.mxu0
    %v449 = vadd.f32 %v304, %v448
    %v450 = vpop.f32.mrf.mxu0
    %v451 = vpop.f32.mrf.mxu0
    %v452 = vadd.f32 %v307, %v451
    %v453 = vpop.f32.mrf.mxu0
    %454 = vmatprep.mubr.bf16.mxu0 0
    %455 = vmatmul.mubr.bf16.gmra.mxu0 %v179
    %v456 = vpop.f32.mrf.mxu0
    %v457 = vadd.f32 %v312, %v456
    %v458 = vpop.f32.mrf.mxu0
    %v459 = vpop.f32.mrf.mxu0
    %v460 = vadd.f32 %v315, %v459
    %v461 = vpop.f32.mrf.mxu0
    %462 = vmatprep.mubr.bf16.mxu0 0
    %463 = vmatmul.mubr.bf16.gmra.mxu0 %v180
    %v464 = vpop.f32.mrf.mxu0
    %v465 = vadd.f32 %v320, %v464
    %v466 = vpop.f32.mrf.mxu0
    %v467 = vpop.f32.mrf.mxu0
    %v468 = vadd.f32 %v323, %v467
    %v469 = vpop.f32.mrf.mxu0
    %470 = vdwg.mxu0
    %471 = vst [vmem:[#allocation8] sm:$0xff] %v409
    %472 = vst [vmem:[#allocation8 + $0x8] sm:$0xff] %v412
    %473 = vst [vmem:[#allocation8 + $0x10] sm:$0xff] %v417
    %474 = vst [vmem:[#allocation8 + $0x18] sm:$0xff] %v420
    %475 = vst [vmem:[#allocation8 + $0x20] sm:$0xff] %v425
    %476 = vst [vmem:[#allocation8 + $0x28] sm:$0xff] %v428
    %477 = vst [vmem:[#allocation8 + $0x30] sm:$0xff] %v433
    %478 = vst [vmem:[#allocation8 + $0x38] sm:$0xff] %v436
    %479 = vst [vmem:[#allocation8 + $0x40] sm:$0xff] %v441
    %480 = vst [vmem:[#allocation8 + $0x48] sm:$0xff] %v444
    %481 = vst [vmem:[#allocation8 + $0x50] sm:$0xff] %v449
    %482 = vst [vmem:[#allocation8 + $0x58] sm:$0xff] %v452
    %483 = vst [vmem:[#allocation8 + $0x60] sm:$0xff] %v457
    %484 = vst [vmem:[#allocation8 + $0x68] sm:$0xff] %v460
    %485 = vst [vmem:[#allocation8 + $0x70] sm:$0xff] %v465
    %486 = vst [vmem:[#allocation8 + $0x78] sm:$0xff] %v468
    // Predicated region
    $region26: #{tpu_custom_call.1} parent=1 // pred_check
      _
    $region27: #{tpu_custom_call.1} parent=1 // pred_check_branch
      %488 = sbr.rel (0) target = $region29
    $region28: #{tpu_custom_call.1} parent=1 // pred_region
      %s490 = ssub.s32 2048, 2048
      %491 = vsyncadd [#allocation4], %s490
      %s492 = sshll.u32 [#allocation8], 4
      %s493 = int_to_ptr.vmem [resolvable:$true] %s492
      %498 = dma.vmem_to_hbm [thread:$0]  %s493, 2048, %s3, [#allocation4], 128, 128, 8
    $region29: #{tpu_custom_call.1} parent=1 // pred_fallthru
      _
    // Predicated region
    $region30: #{tpu_custom_call.1} parent=1 // pred_check
      _
    $region31: #{tpu_custom_call.1} parent=1 // pred_check_branch
      %500 = sbr.rel (0) target = $region33
    $region32: #{tpu_custom_call.1} parent=1 // pred_region
      %501 = dma.done [#allocation4], 2048
    $region33: #{tpu_custom_call.1} parent=1 // pred_fallthru
      _
    %502 = vsyncpa [#allocation3], 1
    %503 = vsyncpa [#allocation6], 1
    %504 = vsyncpa [#allocation4], 1

</llo_original>
